<compile_context>
chip_gen: v5e
topology: v5e:2x2
jax: 0.10.0
libtpu: 0.0.40
codegen_flags: <defaults>
</compile_context>

<pallas_src>
import jax
import jax.numpy as jnp
from jax.experimental import pallas as pl
from jax.experimental.pallas import tpu as pltpu


def _spatial_down3d_kernel(x_ref, w_ref, b_ref, o_ref, acc_ref):
    # x_ref  : (2, 2, Hp, Wp, Ci)  phase-decomposed zero-padded source frame,
    #                              phase (a, b)[i, j, :] == x_pad[2*i + a, 2*j + b, :]
    # w_ref  : (27, Ci, Cb)        all taps, flat index kt*9 + kh*3 + kw
    # b_ref  : (1, Cb)             bias block
    # o_ref  : (Ho, Wo, Cb)        output frame t, C_out block co
    # acc_ref: (Ho*Wo, Cb) f32     accumulator, resident across the kt axis
    kt = pl.program_id(3)
    Ho, Wo, Cb = o_ref.shape
    Ci = x_ref.shape[-1]

    @pl.when(kt == 0)
    def _init():
        acc_ref[...] = jnp.zeros_like(acc_ref)

    # 9 spatial taps of this temporal tap -> 9 MXU matmuls, f32 accumulation.
    acc = jnp.zeros((Ho * Wo, Cb), jnp.float32)
    for kh in range(3):
        a, dh = kh % 2, kh // 2
        for kw in range(3):
            b, dw = kw % 2, kw // 2
            patch = x_ref[a, b, pl.ds(dh, Ho), pl.ds(dw, Wo), :]      # (Ho, Wo, Ci)
            w_tap = w_ref[kt * 9 + kh * 3 + kw]                        # (Ci, Cb)
            acc = acc + jnp.dot(patch.reshape(Ho * Wo, Ci), w_tap,
                                preferred_element_type=jnp.float32)
    acc_ref[...] += acc

    @pl.when(kt == pl.num_programs(3) - 1)
    def _finalize():
        out = acc_ref[...] + b_ref[...].astype(jnp.float32)
        o_ref[...] = out.reshape(Ho, Wo, Cb).astype(o_ref.dtype)


def spatial_downsampler_3d(x: jax.Array, weight: jax.Array, bias: jax.Array) -> jax.Array:
    """SpatialDownsampler3D forward.

    x:      (B, C_in, T, H, W)     NCDHW (PyTorch layout)
    weight: (C_out, C_in, 3, 3, 3) Conv3d weight
    bias:   (C_out,)
    returns (B, C_out, T, Ho, Wo) with Ho = (H - 2)//2 + 1, Wo = (W - 2)//2 + 1.
    """
    B, Ci, T, H, W = x.shape
    Co = weight.shape[0]
    Ho = (H - 2) // 2 + 1      # == (H + 1 - 3)//2 + 1
    Wo = (W - 2) // 2 + 1
    Hp, Wp = Ho + 1, Wo + 1

    # --- wrapper-side layout prep (one fused XLA pad+reshape+transpose pass) ---
    # Zero-pad bottom/right; row H / col W are exactly F.pad's zeros, anything
    # further is never read by the conv.
    x_p = jnp.pad(x, ((0, 0), (0, 0), (0, 0), (0, 2 * Hp - H), (0, 2 * Wp - W)))
    # Space-to-depth phase decomposition: phase (a, b) plane = x_p[..., a::2, b::2].
    x_ph = x_p.reshape(B, Ci, T, Hp, 2, Wp, 2)
    x_ph = jnp.transpose(x_ph, (0, 2, 4, 6, 3, 5, 1))   # (B, T, 2, 2, Hp, Wp, Ci)

    # Weights: (Co, Ci, kt, kh, kw) -> (kt*9 + kh*3 + kw, Ci, Co); bias -> (1, Co).
    w_cl = jnp.transpose(weight, (2, 3, 4, 1, 0)).reshape(27, Ci, Co)
    b_cl = bias.reshape(1, Co)

    # Tile C_out so weight/output/accumulator blocks stay small and lane-dense.
    itemsize = jnp.dtype(x.dtype).itemsize
    if Co % 128 == 0:
        cb = 256 if (Co % 256 == 0 and 27 * Ci * 256 * itemsize <= 8 * 2**20) else 128
    else:
        cb = Co
    n_co = Co // cb

    grid = (B, n_co, T, 3)   # temporal tap kt is the innermost reduction axis

    out_cl = pl.pallas_call(
        _spatial_down3d_kernel,
        out_shape=jax.ShapeDtypeStruct((B, T, Ho, Wo, Co), x.dtype),
        grid_spec=pltpu.PrefetchScalarGridSpec(
            num_scalar_prefetch=0,
            grid=grid,
            in_specs=[
                # Source frame max(t + kt - 2, 0): causal "replicate first
                # frame" temporal padding folded into the index_map.
                pl.BlockSpec(
                    (None, None, 2, 2, Hp, Wp, Ci),
                    lambda b, co, t, kt: (b, jnp.maximum(t + kt - 2, 0), 0, 0, 0, 0, 0)),
                # Full 27-tap weight for this C_out block; index ignores
                # (b, t, kt) so it is re-DMA'd only when `co` changes.
                pl.BlockSpec((27, Ci, cb), lambda b, co, t, kt: (0, 0, co)),
                pl.BlockSpec((1, cb), lambda b, co, t, kt: (0, co)),
            ],
            out_specs=pl.BlockSpec(
                (None, None, Ho, Wo, cb),
                lambda b, co, t, kt: (b, t, 0, 0, co)),
            scratch_shapes=[
                pltpu.VMEM((Ho * Wo, cb), jnp.float32),   # f32 accumulator
            ],
        ),
        compiler_params=pltpu.CompilerParams(
            dimension_semantics=("parallel", "parallel", "parallel", "arbitrary"),
            # Above the 32 MiB default so bigger weight/frame blocks fit on
            # v5e/v6e, below the 64 MiB v7x physical VMEM budget.
            vmem_limit_bytes=48 * 1024 * 1024,
        ),
    )(x_ph, w_cl, b_cl)

    # NDHWC -> NCDHW to match the PyTorch module's output layout.
    return jnp.transpose(out_cl, (0, 4, 1, 2, 3))


def _reference(x, weight, bias):
    """Plain-JAX reference with identical semantics (causal replicate time pad,
    +1 bottom/right spatial zero pad, Conv3d stride (1,2,2), no extra pad)."""
    xp = jnp.pad(x, ((0, 0), (0, 0), (2, 0), (0, 0), (0, 0)), mode="edge")
    xp = jnp.pad(xp, ((0, 0), (0, 0), (0, 0), (0, 1), (0, 1)))
    y = jax.lax.conv_general_dilated(
        xp, weight,
        window_strides=(1, 2, 2),
        padding=((0, 0), (0, 0), (0, 0)),
        dimension_numbers=("NCDHW", "OIDHW", "NCDHW"),
        precision=jax.lax.Precision.HIGHEST,
    )
    return y + bias[None, :, None, None, None]


if __name__ == "__main__":
    key = jax.random.PRNGKey(0)
    kx, kw, kb = jax.random.split(key, 3)

    B, Cin, Cout, T, H, W = 2, 4, 4, 5, 16, 16
    x = jax.random.normal(kx, (B, Cin, T, H, W), dtype=jnp.float32)
    fan_in = Cin * 3 * 3 * 3
    weight = jax.random.normal(kw, (Cout, Cin, 3, 3, 3), jnp.float32) * (1.0 / fan_in ** 0.5)
    bias = jax.random.normal(kb, (Cout,), jnp.float32) * 0.1

    y = spatial_downsampler_3d(x, weight, bias)
    y = jax.block_until_ready(y)

    y_ref = _reference(x, weight, bias)
    assert y.shape == (B, Cout, T, H // 2, W // 2), y.shape
    max_err = float(jnp.max(jnp.abs(y - y_ref)))
    assert jnp.allclose(y, y_ref, atol=2e-2, rtol=2e-2), f"max abs err = {max_err}"

    print("KERNEL_OK")
</pallas_src>

<mosaic_0001>
module attributes {stable_mosaic.version = 11 : i64} {
  func.func @_spatial_down3d_kernel(%arg0: i32, %arg1: i32, %arg2: i32, %arg3: i32, %arg4: memref<1x1x2x2x9x9x4xf32, #tpu.memory_space<vmem>>, %arg5: memref<27x4x4xf32, #tpu.memory_space<vmem>>, %arg6: memref<1x4xf32, #tpu.memory_space<vmem>>, %arg7: memref<1x1x8x8x4xf32, #tpu.memory_space<vmem>>, %arg8: memref<64x4xf32, #tpu.memory_space<vmem>>) attributes {dimension_semantics = [#tpu.dimension_semantics<parallel>, #tpu.dimension_semantics<parallel>, #tpu.dimension_semantics<parallel>, #tpu.dimension_semantics<arbitrary>], iteration_bounds = array<i64: 2, 1, 5, 3>, scalar_prefetch = 0 : i64, scratch_operands = 1 : i64, tpu.core_type = #tpu.core_type<tc>, window_params = [{transform_indices = @transform_0, window_bounds = array<i64: 1, 1, 2, 2, 9, 9, 4>}, {transform_indices = @transform_1, window_bounds = array<i64: 27, 4, 4>}, {transform_indices = @transform_2, window_bounds = array<i64: 1, 4>}, {transform_indices = @transform_3, window_bounds = array<i64: 1, 1, 8, 8, 4>}]} {
    %c0_i32 = arith.constant 0 : i32
    %0 = arith.cmpi eq, %arg3, %c0_i32 : i32
    %1 = arith.extui %0 : i1 to i32
    %c0_i32_0 = arith.constant 0 : i32
    %2 = arith.cmpi ne, %1, %c0_i32_0 : i32
    scf.if %2 {
      %cst_117 = arith.constant 0.000000e+00 : f32
      %109 = vector.broadcast %cst_117 : f32 to vector<64x4xf32>
      %c0_118 = arith.constant 0 : index
      %c0_119 = arith.constant 0 : index
      %110 = vector.load %arg8[%c0_118, %c0_119] : memref<64x4xf32, #tpu.memory_space<vmem>>, vector<64x4xf32>
      tpu.vector_store %arg8[%c0_118, %c0_119], %109 {strides = array<i32>} : memref<64x4xf32, #tpu.memory_space<vmem>>, vector<64x4xf32>,
    } else {
    }
    %cst = arith.constant 0.000000e+00 : f32
    %3 = vector.broadcast %cst : f32 to vector<64x4xf32>
    %c0 = arith.constant 0 : index
    %c0_1 = arith.constant 0 : index
    %c0_2 = arith.constant 0 : index
    %c0_3 = arith.constant 0 : index
    %c0_4 = arith.constant 0 : index
    %c0_5 = arith.constant 0 : index
    %c0_6 = arith.constant 0 : index
    %4 = vector.load %arg4[%c0, %c0_1, %c0_2, %c0_3, %c0_4, %c0_5, %c0_6] : memref<1x1x2x2x9x9x4xf32, #tpu.memory_space<vmem>>, vector<1x1x1x1x8x8x4xf32>
    %5 = vector.shape_cast %4 : vector<1x1x1x1x8x8x4xf32> to vector<8x8x4xf32>
    %c9_i32 = arith.constant 9 : i32
    %6 = arith.muli %arg3, %c9_i32 : i32
    %c0_i32_7 = arith.constant 0 : i32
    %7 = arith.addi %6, %c0_i32_7 : i32
    %c0_i32_8 = arith.constant 0 : i32
    %8 = arith.addi %7, %c0_i32_8 : i32
    %9 = arith.index_cast %8 : i32 to index
    %c0_9 = arith.constant 0 : index
    %c0_10 = arith.constant 0 : index
    %10 = vector.load %arg5[%9, %c0_9, %c0_10] : memref<27x4x4xf32, #tpu.memory_space<vmem>>, vector<1x4x4xf32>
    %11 = vector.shape_cast %10 : vector<1x4x4xf32> to vector<4x4xf32>
    %12 = vector.shape_cast %5 : vector<8x8x4xf32> to vector<64x4xf32>
    %cst_11 = arith.constant dense<0.000000e+00> : vector<64x4xf32>
    %13 = tpu.matmul %12, %11, %cst_11 {dimension_numbers = #tpu.dot_dimension_numbers<[1], [0], [0], [1], [0, 0, 1, 1], [], []>} : vector<64x4xf32>, vector<4x4xf32>, vector<64x4xf32> -> vector<64x4xf32>
    %14 = arith.addf %3, %13 : vector<64x4xf32>
    %c0_12 = arith.constant 0 : index
    %c0_13 = arith.constant 0 : index
    %c0_14 = arith.constant 0 : index
    %c1 = arith.constant 1 : index
    %c0_15 = arith.constant 0 : index
    %c0_16 = arith.constant 0 : index
    %c0_17 = arith.constant 0 : index
    %15 = vector.load %arg4[%c0_12, %c0_13, %c0_14, %c1, %c0_15, %c0_16, %c0_17] : memref<1x1x2x2x9x9x4xf32, #tpu.memory_space<vmem>>, vector<1x1x1x1x8x8x4xf32>
    %16 = vector.shape_cast %15 : vector<1x1x1x1x8x8x4xf32> to vector<8x8x4xf32>
    %c9_i32_18 = arith.constant 9 : i32
    %17 = arith.muli %arg3, %c9_i32_18 : i32
    %c0_i32_19 = arith.constant 0 : i32
    %18 = arith.addi %17, %c0_i32_19 : i32
    %c1_i32 = arith.constant 1 : i32
    %19 = arith.addi %18, %c1_i32 : i32
    %20 = arith.index_cast %19 : i32 to index
    %c0_20 = arith.constant 0 : index
    %c0_21 = arith.constant 0 : index
    %21 = vector.load %arg5[%20, %c0_20, %c0_21] : memref<27x4x4xf32, #tpu.memory_space<vmem>>, vector<1x4x4xf32>
    %22 = vector.shape_cast %21 : vector<1x4x4xf32> to vector<4x4xf32>
    %23 = vector.shape_cast %16 : vector<8x8x4xf32> to vector<64x4xf32>
    %cst_22 = arith.constant dense<0.000000e+00> : vector<64x4xf32>
    %24 = tpu.matmul %23, %22, %cst_22 {dimension_numbers = #tpu.dot_dimension_numbers<[1], [0], [0], [1], [0, 0, 1, 1], [], []>} : vector<64x4xf32>, vector<4x4xf32>, vector<64x4xf32> -> vector<64x4xf32>
    %25 = arith.addf %14, %24 : vector<64x4xf32>
    %c0_23 = arith.constant 0 : index
    %c0_24 = arith.constant 0 : index
    %c0_25 = arith.constant 0 : index
    %c0_26 = arith.constant 0 : index
    %c0_27 = arith.constant 0 : index
    %c1_28 = arith.constant 1 : index
    %c0_29 = arith.constant 0 : index
    %26 = vector.load %arg4[%c0_23, %c0_24, %c0_25, %c0_26, %c0_27, %c1_28, %c0_29] : memref<1x1x2x2x9x9x4xf32, #tpu.memory_space<vmem>>, vector<1x1x1x1x8x8x4xf32>
    %27 = vector.shape_cast %26 : vector<1x1x1x1x8x8x4xf32> to vector<8x8x4xf32>
    %c9_i32_30 = arith.constant 9 : i32
    %28 = arith.muli %arg3, %c9_i32_30 : i32
    %c0_i32_31 = arith.constant 0 : i32
    %29 = arith.addi %28, %c0_i32_31 : i32
    %c2_i32 = arith.constant 2 : i32
    %30 = arith.addi %29, %c2_i32 : i32
    %31 = arith.index_cast %30 : i32 to index
    %c0_32 = arith.constant 0 : index
    %c0_33 = arith.constant 0 : index
    %32 = vector.load %arg5[%31, %c0_32, %c0_33] : memref<27x4x4xf32, #tpu.memory_space<vmem>>, vector<1x4x4xf32>
    %33 = vector.shape_cast %32 : vector<1x4x4xf32> to vector<4x4xf32>
    %34 = vector.shape_cast %27 : vector<8x8x4xf32> to vector<64x4xf32>
    %cst_34 = arith.constant dense<0.000000e+00> : vector<64x4xf32>
    %35 = tpu.matmul %34, %33, %cst_34 {dimension_numbers = #tpu.dot_dimension_numbers<[1], [0], [0], [1], [0, 0, 1, 1], [], []>} : vector<64x4xf32>, vector<4x4xf32>, vector<64x4xf32> -> vector<64x4xf32>
    %36 = arith.addf %25, %35 : vector<64x4xf32>
    %c0_35 = arith.constant 0 : index
    %c0_36 = arith.constant 0 : index
    %c1_37 = arith.constant 1 : index
    %c0_38 = arith.constant 0 : index
    %c0_39 = arith.constant 0 : index
    %c0_40 = arith.constant 0 : index
    %c0_41 = arith.constant 0 : index
    %37 = vector.load %arg4[%c0_35, %c0_36, %c1_37, %c0_38, %c0_39, %c0_40, %c0_41] : memref<1x1x2x2x9x9x4xf32, #tpu.memory_space<vmem>>, vector<1x1x1x1x8x8x4xf32>
    %38 = vector.shape_cast %37 : vector<1x1x1x1x8x8x4xf32> to vector<8x8x4xf32>
    %c9_i32_42 = arith.constant 9 : i32
    %39 = arith.muli %arg3, %c9_i32_42 : i32
    %c3_i32 = arith.constant 3 : i32
    %40 = arith.addi %39, %c3_i32 : i32
    %c0_i32_43 = arith.constant 0 : i32
    %41 = arith.addi %40, %c0_i32_43 : i32
    %42 = arith.index_cast %41 : i32 to index
    %c0_44 = arith.constant 0 : index
    %c0_45 = arith.constant 0 : index
    %43 = vector.load %arg5[%42, %c0_44, %c0_45] : memref<27x4x4xf32, #tpu.memory_space<vmem>>, vector<1x4x4xf32>
    %44 = vector.shape_cast %43 : vector<1x4x4xf32> to vector<4x4xf32>
    %45 = vector.shape_cast %38 : vector<8x8x4xf32> to vector<64x4xf32>
    %cst_46 = arith.constant dense<0.000000e+00> : vector<64x4xf32>
    %46 = tpu.matmul %45, %44, %cst_46 {dimension_numbers = #tpu.dot_dimension_numbers<[1], [0], [0], [1], [0, 0, 1, 1], [], []>} : vector<64x4xf32>, vector<4x4xf32>, vector<64x4xf32> -> vector<64x4xf32>
    %47 = arith.addf %36, %46 : vector<64x4xf32>
    %c0_47 = arith.constant 0 : index
    %c0_48 = arith.constant 0 : index
    %c1_49 = arith.constant 1 : index
    %c1_50 = arith.constant 1 : index
    %c0_51 = arith.constant 0 : index
    %c0_52 = arith.constant 0 : index
    %c0_53 = arith.constant 0 : index
    %48 = vector.load %arg4[%c0_47, %c0_48, %c1_49, %c1_50, %c0_51, %c0_52, %c0_53] : memref<1x1x2x2x9x9x4xf32, #tpu.memory_space<vmem>>, vector<1x1x1x1x8x8x4xf32>
    %49 = vector.shape_cast %48 : vector<1x1x1x1x8x8x4xf32> to vector<8x8x4xf32>
    %c9_i32_54 = arith.constant 9 : i32
    %50 = arith.muli %arg3, %c9_i32_54 : i32
    %c3_i32_55 = arith.constant 3 : i32
    %51 = arith.addi %50, %c3_i32_55 : i32
    %c1_i32_56 = arith.constant 1 : i32
    %52 = arith.addi %51, %c1_i32_56 : i32
    %53 = arith.index_cast %52 : i32 to index
    %c0_57 = arith.constant 0 : index
    %c0_58 = arith.constant 0 : index
    %54 = vector.load %arg5[%53, %c0_57, %c0_58] : memref<27x4x4xf32, #tpu.memory_space<vmem>>, vector<1x4x4xf32>
    %55 = vector.shape_cast %54 : vector<1x4x4xf32> to vector<4x4xf32>
    %56 = vector.shape_cast %49 : vector<8x8x4xf32> to vector<64x4xf32>
    %cst_59 = arith.constant dense<0.000000e+00> : vector<64x4xf32>
    %57 = tpu.matmul %56, %55, %cst_59 {dimension_numbers = #tpu.dot_dimension_numbers<[1], [0], [0], [1], [0, 0, 1, 1], [], []>} : vector<64x4xf32>, vector<4x4xf32>, vector<64x4xf32> -> vector<64x4xf32>
    %58 = arith.addf %47, %57 : vector<64x4xf32>
    %c0_60 = arith.constant 0 : index
    %c0_61 = arith.constant 0 : index
    %c1_62 = arith.constant 1 : index
    %c0_63 = arith.constant 0 : index
    %c0_64 = arith.constant 0 : index
    %c1_65 = arith.constant 1 : index
    %c0_66 = arith.constant 0 : index
    %59 = vector.load %arg4[%c0_60, %c0_61, %c1_62, %c0_63, %c0_64, %c1_65, %c0_66] : memref<1x1x2x2x9x9x4xf32, #tpu.memory_space<vmem>>, vector<1x1x1x1x8x8x4xf32>
    %60 = vector.shape_cast %59 : vector<1x1x1x1x8x8x4xf32> to vector<8x8x4xf32>
    %c9_i32_67 = arith.constant 9 : i32
    %61 = arith.muli %arg3, %c9_i32_67 : i32
    %c3_i32_68 = arith.constant 3 : i32
    %62 = arith.addi %61, %c3_i32_68 : i32
    %c2_i32_69 = arith.constant 2 : i32
    %63 = arith.addi %62, %c2_i32_69 : i32
    %64 = arith.index_cast %63 : i32 to index
    %c0_70 = arith.constant 0 : index
    %c0_71 = arith.constant 0 : index
    %65 = vector.load %arg5[%64, %c0_70, %c0_71] : memref<27x4x4xf32, #tpu.memory_space<vmem>>, vector<1x4x4xf32>
    %66 = vector.shape_cast %65 : vector<1x4x4xf32> to vector<4x4xf32>
    %67 = vector.shape_cast %60 : vector<8x8x4xf32> to vector<64x4xf32>
    %cst_72 = arith.constant dense<0.000000e+00> : vector<64x4xf32>
    %68 = tpu.matmul %67, %66, %cst_72 {dimension_numbers = #tpu.dot_dimension_numbers<[1], [0], [0], [1], [0, 0, 1, 1], [], []>} : vector<64x4xf32>, vector<4x4xf32>, vector<64x4xf32> -> vector<64x4xf32>
    %69 = arith.addf %58, %68 : vector<64x4xf32>
    %c0_73 = arith.constant 0 : index
    %c0_74 = arith.constant 0 : index
    %c0_75 = arith.constant 0 : index
    %c0_76 = arith.constant 0 : index
    %c1_77 = arith.constant 1 : index
    %c0_78 = arith.constant 0 : index
    %c0_79 = arith.constant 0 : index
    %70 = vector.load %arg4[%c0_73, %c0_74, %c0_75, %c0_76, %c1_77, %c0_78, %c0_79] : memref<1x1x2x2x9x9x4xf32, #tpu.memory_space<vmem>>, vector<1x1x1x1x8x8x4xf32>
    %71 = vector.shape_cast %70 : vector<1x1x1x1x8x8x4xf32> to vector<8x8x4xf32>
    %c9_i32_80 = arith.constant 9 : i32
    %72 = arith.muli %arg3, %c9_i32_80 : i32
    %c6_i32 = arith.constant 6 : i32
    %73 = arith.addi %72, %c6_i32 : i32
    %c0_i32_81 = arith.constant 0 : i32
    %74 = arith.addi %73, %c0_i32_81 : i32
    %75 = arith.index_cast %74 : i32 to index
    %c0_82 = arith.constant 0 : index
    %c0_83 = arith.constant 0 : index
    %76 = vector.load %arg5[%75, %c0_82, %c0_83] : memref<27x4x4xf32, #tpu.memory_space<vmem>>, vector<1x4x4xf32>
    %77 = vector.shape_cast %76 : vector<1x4x4xf32> to vector<4x4xf32>
    %78 = vector.shape_cast %71 : vector<8x8x4xf32> to vector<64x4xf32>
    %cst_84 = arith.constant dense<0.000000e+00> : vector<64x4xf32>
    %79 = tpu.matmul %78, %77, %cst_84 {dimension_numbers = #tpu.dot_dimension_numbers<[1], [0], [0], [1], [0, 0, 1, 1], [], []>} : vector<64x4xf32>, vector<4x4xf32>, vector<64x4xf32> -> vector<64x4xf32>
    %80 = arith.addf %69, %79 : vector<64x4xf32>
    %c0_85 = arith.constant 0 : index
    %c0_86 = arith.constant 0 : index
    %c0_87 = arith.constant 0 : index
    %c1_88 = arith.constant 1 : index
    %c1_89 = arith.constant 1 : index
    %c0_90 = arith.constant 0 : index
    %c0_91 = arith.constant 0 : index
    %81 = vector.load %arg4[%c0_85, %c0_86, %c0_87, %c1_88, %c1_89, %c0_90, %c0_91] : memref<1x1x2x2x9x9x4xf32, #tpu.memory_space<vmem>>, vector<1x1x1x1x8x8x4xf32>
    %82 = vector.shape_cast %81 : vector<1x1x1x1x8x8x4xf32> to vector<8x8x4xf32>
    %c9_i32_92 = arith.constant 9 : i32
    %83 = arith.muli %arg3, %c9_i32_92 : i32
    %c6_i32_93 = arith.constant 6 : i32
    %84 = arith.addi %83, %c6_i32_93 : i32
    %c1_i32_94 = arith.constant 1 : i32
    %85 = arith.addi %84, %c1_i32_94 : i32
    %86 = arith.index_cast %85 : i32 to index
    %c0_95 = arith.constant 0 : index
    %c0_96 = arith.constant 0 : index
    %87 = vector.load %arg5[%86, %c0_95, %c0_96] : memref<27x4x4xf32, #tpu.memory_space<vmem>>, vector<1x4x4xf32>
    %88 = vector.shape_cast %87 : vector<1x4x4xf32> to vector<4x4xf32>
    %89 = vector.shape_cast %82 : vector<8x8x4xf32> to vector<64x4xf32>
    %cst_97 = arith.constant dense<0.000000e+00> : vector<64x4xf32>
    %90 = tpu.matmul %89, %88, %cst_97 {dimension_numbers = #tpu.dot_dimension_numbers<[1], [0], [0], [1], [0, 0, 1, 1], [], []>} : vector<64x4xf32>, vector<4x4xf32>, vector<64x4xf32> -> vector<64x4xf32>
    %91 = arith.addf %80, %90 : vector<64x4xf32>
    %c0_98 = arith.constant 0 : index
    %c0_99 = arith.constant 0 : index
    %c0_100 = arith.constant 0 : index
    %c0_101 = arith.constant 0 : index
    %c1_102 = arith.constant 1 : index
    %c1_103 = arith.constant 1 : index
    %c0_104 = arith.constant 0 : index
    %92 = vector.load %arg4[%c0_98, %c0_99, %c0_100, %c0_101, %c1_102, %c1_103, %c0_104] : memref<1x1x2x2x9x9x4xf32, #tpu.memory_space<vmem>>, vector<1x1x1x1x8x8x4xf32>
    %93 = vector.shape_cast %92 : vector<1x1x1x1x8x8x4xf32> to vector<8x8x4xf32>
    %c9_i32_105 = arith.constant 9 : i32
    %94 = arith.muli %arg3, %c9_i32_105 : i32
    %c6_i32_106 = arith.constant 6 : i32
    %95 = arith.addi %94, %c6_i32_106 : i32
    %c2_i32_107 = arith.constant 2 : i32
    %96 = arith.addi %95, %c2_i32_107 : i32
    %97 = arith.index_cast %96 : i32 to index
    %c0_108 = arith.constant 0 : index
    %c0_109 = arith.constant 0 : index
    %98 = vector.load %arg5[%97, %c0_108, %c0_109] : memref<27x4x4xf32, #tpu.memory_space<vmem>>, vector<1x4x4xf32>
    %99 = vector.shape_cast %98 : vector<1x4x4xf32> to vector<4x4xf32>
    %100 = vector.shape_cast %93 : vector<8x8x4xf32> to vector<64x4xf32>
    %cst_110 = arith.constant dense<0.000000e+00> : vector<64x4xf32>
    %101 = tpu.matmul %100, %99, %cst_110 {dimension_numbers = #tpu.dot_dimension_numbers<[1], [0], [0], [1], [0, 0, 1, 1], [], []>} : vector<64x4xf32>, vector<4x4xf32>, vector<64x4xf32> -> vector<64x4xf32>
    %102 = arith.addf %91, %101 : vector<64x4xf32>
    %c0_111 = arith.constant 0 : index
    %c0_112 = arith.constant 0 : index
    %103 = vector.load %arg8[%c0_111, %c0_112] : memref<64x4xf32, #tpu.memory_space<vmem>>, vector<64x4xf32>
    %104 = arith.addf %103, %102 : vector<64x4xf32>
    %c0_113 = arith.constant 0 : index
    %c0_114 = arith.constant 0 : index
    %105 = vector.load %arg8[%c0_113, %c0_114] : memref<64x4xf32, #tpu.memory_space<vmem>>, vector<64x4xf32>
    tpu.vector_store %arg8[%c0_113, %c0_114], %104 {strides = array<i32>} : memref<64x4xf32, #tpu.memory_space<vmem>>, vector<64x4xf32>,
    %c2_i32_115 = arith.constant 2 : i32
    %106 = arith.cmpi eq, %arg3, %c2_i32_115 : i32
    %107 = arith.extui %106 : i1 to i32
    %c0_i32_116 = arith.constant 0 : i32
    %108 = arith.cmpi ne, %107, %c0_i32_116 : i32
    scf.if %108 {
      %c0_117 = arith.constant 0 : index
      %c0_118 = arith.constant 0 : index
      %109 = vector.load %arg8[%c0_117, %c0_118] : memref<64x4xf32, #tpu.memory_space<vmem>>, vector<64x4xf32>
      %c0_119 = arith.constant 0 : index
      %c0_120 = arith.constant 0 : index
      %110 = vector.load %arg6[%c0_119, %c0_120] : memref<1x4xf32, #tpu.memory_space<vmem>>, vector<1x4xf32>
      %111 = vector.broadcast %110 : vector<1x4xf32> to vector<64x4xf32>
      %112 = arith.addf %109, %111 : vector<64x4xf32>
      %113 = vector.shape_cast %112 : vector<64x4xf32> to vector<8x8x4xf32>
      %c0_121 = arith.constant 0 : index
      %c0_122 = arith.constant 0 : index
      %c0_123 = arith.constant 0 : index
      %c0_124 = arith.constant 0 : index
      %c0_125 = arith.constant 0 : index
      %114 = vector.load %arg7[%c0_121, %c0_122, %c0_123, %c0_124, %c0_125] : memref<1x1x8x8x4xf32, #tpu.memory_space<vmem>>, vector<1x1x8x8x4xf32>
      %115 = vector.shape_cast %114 : vector<1x1x8x8x4xf32> to vector<8x8x4xf32>
      %116 = vector.shape_cast %113 : vector<8x8x4xf32> to vector<1x1x8x8x4xf32>
      tpu.vector_store %arg7[%c0_121, %c0_122, %c0_123, %c0_124, %c0_125], %116 {strides = array<i32>} : memref<1x1x8x8x4xf32, #tpu.memory_space<vmem>>, vector<1x1x8x8x4xf32>,
    } else {
    }
    return
  }
  func.func @transform_0(%arg0: i32, %arg1: i32, %arg2: i32, %arg3: i32) -> (i32, i32, i32, i32, i32, i32, i32) {
    %0 = arith.addi %arg2, %arg3 : i32
    %c2_i32 = arith.constant 2 : i32
    %1 = arith.subi %0, %c2_i32 : i32
    %c0_i32 = arith.constant 0 : i32
    %2 = arith.maxsi %1, %c0_i32 : i32
    %c0_i32_0 = arith.constant 0 : i32
    %c0_i32_1 = arith.constant 0 : i32
    %c0_i32_2 = arith.constant 0 : i32
    %c0_i32_3 = arith.constant 0 : i32
    %c0_i32_4 = arith.constant 0 : i32
    %c0_i32_5 = arith.constant 0 : i32
    return %arg0, %2, %c0_i32_0, %c0_i32_1, %c0_i32_2, %c0_i32_3, %c0_i32_4 : i32, i32, i32, i32, i32, i32, i32
  }
  func.func @transform_1(%arg0: i32, %arg1: i32, %arg2: i32, %arg3: i32) -> (i32, i32, i32) {
    %c0_i32 = arith.constant 0 : i32
    %c0_i32_0 = arith.constant 0 : i32
    %c0_i32_1 = arith.constant 0 : i32
    return %c0_i32, %c0_i32_0, %arg1 : i32, i32, i32
  }
  func.func @transform_2(%arg0: i32, %arg1: i32, %arg2: i32, %arg3: i32) -> (i32, i32) {
    %c0_i32 = arith.constant 0 : i32
    %c0_i32_0 = arith.constant 0 : i32
    return %c0_i32, %arg1 : i32, i32
  }
  func.func @transform_3(%arg0: i32, %arg1: i32, %arg2: i32, %arg3: i32) -> (i32, i32, i32, i32, i32) {
    %c0_i32 = arith.constant 0 : i32
    %c0_i32_0 = arith.constant 0 : i32
    %c0_i32_1 = arith.constant 0 : i32
    return %arg0, %arg2, %c0_i32, %c0_i32_0, %arg1 : i32, i32, i32, i32, i32
  }
}

</mosaic_0001>

<llo_original>
// kernel: tpu_custom_call.1
$region0: #{tpu_custom_call.1}
  #allocation0 [shape = 'u32[]', space=smem, size = 0x4, offset = 0x4, fixed_abs, tag = 'smem constant byte address 0x4 - core index']
  #allocation1 [shape = 'u32[72,128]{1,0:T(1,128)}', space=vmem, size = 0x9000, scoped, tag = 'internal scratch']
  #allocation2 [shape = 'f32[64,4]{1,0:T(8,128)}', space=vmem, size = 0x8000, scoped, tag = 'scratch operand']
  %s0 = inlined_call_operand.vmem [shape: f32[2,5,2,2,9,9,4], index: 0, kind: input, shape index: {}]
  %s1 = inlined_call_operand.vmem [shape: f32[27,4,4], index: 1, kind: input, shape index: {}]
  %s2 = inlined_call_operand.vmem [shape: f32[1,4], index: 2, kind: input, shape index: {}]
  %s3 = inlined_call_operand.vmem [shape: f32[2,5,8,8,4], index: 3, kind: output, shape index: {}]
  %s4 = sld [smem:[#allocation0]]
  $region53: #{tpu_custom_call.1} parent=0
    _
  %s6 = ssub.s32 1, %s4
  %s7 = scalar_select 0, %s6, %s4
  loop: start=0, step=1, limit=32
  $region2: #{tpu_custom_call.1} parent=0 // loop_pre_header
    _
  $region3: #{tpu_custom_call.1} parent=0 // loop_header
    %s9 = sphi 0, %s13
    %p10 = scmp.ge.s32.totalorder %s9, 32
    %s16 = sphi 0, %s42
    %s17 = sphi 0, %s38
    %s18 = sphi 0, %s34
    %s19 = sphi 0, %s30
    %s20 = sphi 0, %s16
    %s21 = sphi 0, %s17
    %s22 = sphi 0, %s18
    %s23 = sphi 0, %s19
    %s24 = sphi 0, %s20
    %s25 = sphi 0, %s21
    %s26 = sphi 0, %s22
    %s27 = sphi 0, %s23
    %s55 = sphi 0, %s57
    %s58 = sphi 0, %s55
    %s59 = sphi 0, %s58
    %s75 = sphi 0, %s59
    %s81 = sphi 0, %s83
    %s84 = sphi 0, %s81
    %s85 = sphi 0, %s84
    %s101 = sphi 0, %s85
    %s107 = sphi 0, %s109
    %s110 = sphi 0, %s107
    %s111 = sphi 0, %s110
    %s127 = sphi 0, %s111
    %s137 = sphi 0, %s139
    %s140 = sphi 0, %s137
    %s141 = sphi 0, %s140
    %s157 = sphi 0, %s141
  $region4: #{tpu_custom_call.1} parent=0 // loop_header_branch
    %12 = sbr.rel (%p10) target = $region8
  $region5: #{tpu_custom_call.1} parent=0 // loop_body
    %s14 = ssub.s32 %s9, 1
    %s15 = ssub.s32 %s9, 2
    %s28 = sadd.s32 1, %s19
    %p29 = scmp.ge.s32.totalorder %s28, 3
    %s30 = scalar_select %p29, 0, %s28
    %s31 = sadd.s32 1, %s18
    %s32 = scalar_select %p29, %s31, %s18
    %p33 = scmp.ge.s32.totalorder %s32, 5
    %s34 = scalar_select %p33, 0, %s32
    %s35 = sadd.s32 1, %s17
    %s36 = scalar_select %p33, %s35, %s17
    %p37 = scmp.ge.s32.totalorder %s36, 1
    %s38 = scalar_select %p37, 0, %s36
    %s39 = sadd.s32 1, %s16
    %s40 = scalar_select %p37, %s39, %s16
    %p41 = scmp.ge.s32.totalorder %s40, 2
    %s42 = scalar_select %p41, 0, %s40
    %s43 = sadd.s32 %s18, %s19
    %s44 = ssub.s32 %s43, 2
    %p45 = scmp.gt.s32.totalorder %s44, 0
    %s46 = scalar_select %p45, %s44, 0
    %s47 = sadd.s32 %s34, %s30
    %s48 = ssub.s32 %s47, 2
    %p49 = scmp.gt.s32.totalorder %s48, 0
    %s50 = scalar_select %p49, %s48, 0
    %s51 = ssub.s32 %s16, %s42
    %s52 = ssub.s32 %s46, %s50
    %s53 = sor.u32 %s51, %s52
    %p54 = scmp.eq.s32.totalorder %s53, 0
    %s56 = sadd.s32 %s55, 1
    %s57 = scalar_select %p54, %s55, %s56
    %p60 = pneg %p54
    %p61 = scmp.eq.s32.totalorder %s9, 29
    %p62 = por %p60, %p61
    %p63 = scmp.ne.s32.totalorder %s55, %s58
    %p64 = scmp.eq.s32.totalorder %s9, 0
    %p65 = por %p63, %p64
    %p66 = scmp.ne.s32.totalorder %s55, %s58
    %p67 = scmp.eq.s32.totalorder %s14, 29
    %p68 = por %p66, %p67
    %p69 = scmp.ne.s32.totalorder %s58, %s59
    %p70 = scmp.eq.s32.totalorder %s14, 0
    %p71 = por %p69, %p70
    %p72 = scmp.ne.s32.totalorder %s58, %s59
    %p73 = scmp.eq.s32.totalorder %s15, 29
    %p74 = por %p72, %p73
    %p76 = scmp.ne.s32.totalorder %s59, %s75
    %p77 = scmp.eq.s32.totalorder %s15, 0
    %p78 = por %p76, %p77
    %s79 = ssub.s32 %s17, %s38
    %p80 = scmp.eq.s32.totalorder %s79, 0
    %s82 = sadd.s32 %s81, 1
    %s83 = scalar_select %p80, %s81, %s82
    %p86 = pneg %p80
    %p87 = scmp.eq.s32.totalorder %s9, 29
    %p88 = por %p86, %p87
    %p89 = scmp.ne.s32.totalorder %s81, %s84
    %p90 = scmp.eq.s32.totalorder %s9, 0
    %p91 = por %p89, %p90
    %p92 = scmp.ne.s32.totalorder %s81, %s84
    %p93 = scmp.eq.s32.totalorder %s14, 29
    %p94 = por %p92, %p93
    %p95 = scmp.ne.s32.totalorder %s84, %s85
    %p96 = scmp.eq.s32.totalorder %s14, 0
    %p97 = por %p95, %p96
    %p98 = scmp.ne.s32.totalorder %s84, %s85
    %p99 = scmp.eq.s32.totalorder %s15, 29
    %p100 = por %p98, %p99
    %p102 = scmp.ne.s32.totalorder %s85, %s101
    %p103 = scmp.eq.s32.totalorder %s15, 0
    %p104 = por %p102, %p103
    %s105 = ssub.s32 %s17, %s38
    %p106 = scmp.eq.s32.totalorder %s105, 0
    %s108 = sadd.s32 %s107, 1
    %s109 = scalar_select %p106, %s107, %s108
    %p112 = pneg %p106
    %p113 = scmp.eq.s32.totalorder %s9, 29
    %p114 = por %p112, %p113
    %p115 = scmp.ne.s32.totalorder %s107, %s110
    %p116 = scmp.eq.s32.totalorder %s9, 0
    %p117 = por %p115, %p116
    %p118 = scmp.ne.s32.totalorder %s107, %s110
    %p119 = scmp.eq.s32.totalorder %s14, 29
    %p120 = por %p118, %p119
    %p121 = scmp.ne.s32.totalorder %s110, %s111
    %p122 = scmp.eq.s32.totalorder %s14, 0
    %p123 = por %p121, %p122
    %p124 = scmp.ne.s32.totalorder %s110, %s111
    %p125 = scmp.eq.s32.totalorder %s15, 29
    %p126 = por %p124, %p125
    %p128 = scmp.ne.s32.totalorder %s111, %s127
    %p129 = scmp.eq.s32.totalorder %s15, 0
    %p130 = por %p128, %p129
    %s131 = ssub.s32 %s16, %s42
    %s132 = ssub.s32 %s18, %s34
    %s133 = sor.u32 %s131, %s132
    %s134 = ssub.s32 %s17, %s38
    %s135 = sor.u32 %s133, %s134
    %p136 = scmp.eq.s32.totalorder %s135, 0
    %s138 = sadd.s32 %s137, 1
    %s139 = scalar_select %p136, %s137, %s138
    %p142 = pneg %p136
    %p143 = scmp.eq.s32.totalorder %s9, 29
    %p144 = por %p142, %p143
    %p145 = scmp.ne.s32.totalorder %s137, %s140
    %p146 = scmp.eq.s32.totalorder %s9, 0
    %p147 = por %p145, %p146
    %p148 = scmp.ne.s32.totalorder %s137, %s140
    %p149 = scmp.eq.s32.totalorder %s14, 29
    %p150 = por %p148, %p149
    %p151 = scmp.ne.s32.totalorder %s140, %s141
    %p152 = scmp.eq.s32.totalorder %s14, 0
    %p153 = por %p151, %p152
    %p154 = scmp.ne.s32.totalorder %s140, %s141
    %p155 = scmp.eq.s32.totalorder %s15, 29
    %p156 = por %p154, %p155
    %p158 = scmp.ne.s32.totalorder %s141, %s157
    %p159 = scmp.eq.s32.totalorder %s15, 0
    %p160 = por %p158, %p159
    %p161 = scmp.le.s32.totalorder 1, %s9
    %p162 = scmp.lt.s32.totalorder %s9, 31
    %p163 = pnand %p161, %p162
    %p164 = pneg %p163
    // Predicated region
    $region9: #{tpu_custom_call.1} parent=5 // pred_check
      _
    $region10: #{tpu_custom_call.1} parent=5 // pred_check_branch
      %166 = sbr.rel (%p163) target = $region12
    $region11: #{tpu_custom_call.1} parent=5 // pred_region
      %s167 = ssub.s32 %s9, 1
      // Predicated region
      $region13: #{tpu_custom_call.1} parent=11 // pred_check
        %p168 = pneg %p97
      $region14: #{tpu_custom_call.1} parent=11 // pred_check_branch
        %170 = sbr.rel (%p168) target = $region16
      $region15: #{tpu_custom_call.1} parent=11 // pred_region
        %p171 = scmp.lt.s32.totalorder %s21, 0
        %s172 = scalar_select %p171, %s21, 0
        %s173 = smul.addr %s172, 4
        %s174 = scalar_lea.vmem %s1, %s173
      $region16: #{tpu_custom_call.1} parent=11 // pred_fallthru
        _
      // Predicated region
      $region17: #{tpu_custom_call.1} parent=11 // pred_check
        %p175 = pneg %p123
      $region18: #{tpu_custom_call.1} parent=11 // pred_check_branch
        %177 = sbr.rel (%p175) target = $region20
      $region19: #{tpu_custom_call.1} parent=11 // pred_region
        %p178 = scmp.lt.s32.totalorder %s21, 0
        %s179 = scalar_select %p178, %s21, 0
        %s180 = scalar_lea.vmem %s2, %s179
      $region20: #{tpu_custom_call.1} parent=11 // pred_fallthru
        _
    $region12: #{tpu_custom_call.1} parent=5 // pred_fallthru
      _
    %p181 = scmp.lt.s32.totalorder %s9, 30
    // Predicated region
    $region21: #{tpu_custom_call.1} parent=5 // pred_check
      %p182 = pneg %p181
    $region22: #{tpu_custom_call.1} parent=5 // pred_check_branch
      %184 = sbr.rel (%p182) target = $region24
    $region23: #{tpu_custom_call.1} parent=5 // pred_region
      // Predicated region
      $region25: #{tpu_custom_call.1} parent=23 // pred_check
        %p185 = pneg %p65
      $region26: #{tpu_custom_call.1} parent=23 // pred_check_branch
        %187 = sbr.rel (%p185) target = $region28
      $region27: #{tpu_custom_call.1} parent=23 // pred_region
        %s188 = sadd.s32 %s18, %s19
        %s189 = ssub.s32 %s188, 2
        %p190 = scmp.gt.s32.totalorder %s189, 0
        %s191 = scalar_select %p190, %s189, 0
        %p192 = scmp.lt.s32.totalorder %s16, 1
        %s193 = scalar_select %p192, %s16, 1
        %p194 = scmp.lt.s32.totalorder %s191, 4
        %s195 = scalar_select %p194, %s191, 4
        %s196 = smul.addr %s195, 72
        %s197 = smul.addr %s193, 360
        %s198 = sadd.s32 %s196, %s197
        %s199 = smul.addr %s198, 8
        %s200 = scalar_lea.vmem %s0, %s199
        %s201 = sadd.s32 %s18, %s19
        %s202 = ssub.s32 %s201, 2
        %p203 = scmp.gt.s32.totalorder %s202, 0
        %s204 = scalar_select %p203, %s202, 0
      $region28: #{tpu_custom_call.1} parent=23 // pred_fallthru
        _
    $region24: #{tpu_custom_call.1} parent=5 // pred_fallthru
      _
    %p205 = scmp.le.s32.totalorder 1, %s9
    %p206 = scmp.lt.s32.totalorder %s9, 31
    %p207 = pnand %p205, %p206
    %p208 = pneg %p207
    // Predicated region
    $region29: #{tpu_custom_call.1} parent=5 // pred_check
      _
    $region30: #{tpu_custom_call.1} parent=5 // pred_check_branch
      %210 = sbr.rel (%p207) target = $region32
    $region31: #{tpu_custom_call.1} parent=5 // pred_region
      %s211 = ssub.s32 %s9, 1
      %s212 = sadd.s32 %s22, %s23
      %s213 = ssub.s32 %s212, 2
      %p214 = scmp.gt.s32.totalorder %s213, 0
      %s215 = scalar_select %p214, %s213, 0
      %p216 = scmp.lt.s32.totalorder %s20, 1
      %s217 = scalar_select %p216, %s20, 1
      %p218 = scmp.lt.s32.totalorder %s215, 4
      %s219 = scalar_select %p218, %s215, 4
      %s220 = smul.addr %s219, 72
      %s221 = smul.addr %s217, 360
      %s222 = sadd.s32 %s220, %s221
      %s223 = smul.addr %s222, 8
      %s224 = scalar_lea.vmem %s0, %s223
      %p225 = pneg %p71
      %p226 = pneg %p68
      %p227 = scmp.lt.s32.totalorder %s21, 0
      %s228 = scalar_select %p227, %s21, 0
      %s229 = smul.addr %s228, 4
      %s230 = scalar_lea.vmem %s1, %s229
      %p231 = pneg %p97
      %p232 = pneg %p94
      %p233 = scmp.lt.s32.totalorder %s21, 0
      %s234 = scalar_select %p233, %s21, 0
      %s235 = scalar_lea.vmem %s2, %s234
      %p236 = pneg %p123
      %p237 = pneg %p120
      %p238 = pneg %p153
      %p239 = pneg %p150
      %p240 = scmp.lt.s32.totalorder %s20, 1
      %s241 = scalar_select %p240, %s20, 1
      %p242 = scmp.lt.s32.totalorder %s22, 4
      %s243 = scalar_select %p242, %s22, 4
      %p244 = scmp.lt.s32.totalorder %s21, 0
      %s245 = scalar_select %p244, %s21, 0
      %s246 = smul.addr %s243, 8
      %s247 = sadd.s32 %s245, %s246
      %s248 = smul.addr %s241, 40
      %s249 = sadd.s32 %s247, %s248
      %s250 = smul.addr %s249, 8
      %s251 = scalar_lea.vmem %s3, %s250
      %s252 = sadd.s32 %s22, %s23
      %s253 = ssub.s32 %s252, 2
      %p254 = scmp.gt.s32.totalorder %s253, 0
      %s255 = scalar_select %p254, %s253, 0
      %p256 = scmp.lt.s32.totalorder %s20, 1
      %s257 = scalar_select %p256, %s20, 1
      %p258 = scmp.lt.s32.totalorder %s255, 4
      %s259 = scalar_select %p258, %s255, 4
      %s260 = smul.addr %s259, 72
      %s261 = smul.addr %s257, 360
      %s262 = sadd.s32 %s260, %s261
      %s263 = smul.addr %s262, 8
      %s264 = scalar_lea.vmem %s0, %s263
      %s265 = sadd.s32 %s22, %s23
      %s266 = ssub.s32 %s265, 2
      %p267 = scmp.gt.s32.totalorder %s266, 0
      %s268 = scalar_select %p267, %s266, 0
      %p269 = scmp.lt.s32.totalorder %s21, 0
      %s270 = scalar_select %p269, %s21, 0
      %s271 = smul.addr %s270, 4
      %s272 = scalar_lea.vmem %s1, %s271
      %p273 = scmp.lt.s32.totalorder %s21, 0
      %s274 = scalar_select %p273, %s21, 0
      %s275 = scalar_lea.vmem %s2, %s274
      %p276 = scmp.lt.s32.totalorder %s20, 1
      %s277 = scalar_select %p276, %s20, 1
      %p278 = scmp.lt.s32.totalorder %s22, 4
      %s279 = scalar_select %p278, %s22, 4
      %p280 = scmp.lt.s32.totalorder %s21, 0
      %s281 = scalar_select %p280, %s21, 0
      %s282 = smul.addr %s279, 8
      %s283 = sadd.s32 %s281, %s282
      %s284 = smul.addr %s277, 40
      %s285 = sadd.s32 %s283, %s284
      %s286 = smul.addr %s285, 8
      %s287 = scalar_lea.vmem %s3, %s286
      %p288 = scmp.eq.s32.totalorder %s23, 0
      // Predicated region
      $region33: #{tpu_custom_call.1} parent=31 // pred_check
        %p289 = pneg %p288
      $region34: #{tpu_custom_call.1} parent=31 // pred_check_branch
        %291 = sbr.rel (%p289) target = $region36
      $region35: #{tpu_custom_call.1} parent=31 // pred_region
        %vm292 = vcmask 31744
        %293 = vst.msk [vmem:[#allocation2] sm:$0xff] %vm292, 0.0
        %294 = vst.msk [vmem:[#allocation2 + $0x8] sm:$0xff] %vm292, 0.0
        %295 = vst.msk [vmem:[#allocation2 + $0x10] sm:$0xff] %vm292, 0.0
        %296 = vst.msk [vmem:[#allocation2 + $0x18] sm:$0xff] %vm292, 0.0
        %297 = vst.msk [vmem:[#allocation2 + $0x20] sm:$0xff] %vm292, 0.0
        %298 = vst.msk [vmem:[#allocation2 + $0x28] sm:$0xff] %vm292, 0.0
        %299 = vst.msk [vmem:[#allocation2 + $0x30] sm:$0xff] %vm292, 0.0
        %300 = vst.msk [vmem:[#allocation2 + $0x38] sm:$0xff] %vm292, 0.0
      $region36: #{tpu_custom_call.1} parent=31 // pred_fallthru
        _
      %v301 = vld [vmem:[%s264] sm:$0xff]
      %v302 = vld [vmem:[%s264 + $0x10] sm:$0xff]
      %v303 = vld [vmem:[%s264 + $0x20] sm:$0xff]
      %v304 = vld [vmem:[%s264 + $0x30] sm:$0xff]
      %v305 = vld [vmem:[%s264 + $0x40] sm:$0xff]
      %v306 = vld [vmem:[%s264 + $0x50] sm:$0xff]
      %v307 = vld [vmem:[%s264 + $0x60] sm:$0xff]
      %v308 = vld [vmem:[%s264 + $0x70] sm:$0xff]
      %s309 = smul.u32 %s23, 9
      %s310 = smul.u32 %s309, 4
      %s311 = scalar_lea.vmem %s272, %s310
      %v312 = vld [vmem:[%s311] sm:$0xf]
      %s313 = scalar_lea.vmem %s264, 144
      %v314 = vld [vmem:[%s313] sm:$0xff]
      %v315 = vld [vmem:[%s313 + $0x10] sm:$0xff]
      %v316 = vld [vmem:[%s313 + $0x20] sm:$0xff]
      %v317 = vld [vmem:[%s313 + $0x30] sm:$0xff]
      %v318 = vld [vmem:[%s313 + $0x40] sm:$0xff]
      %v319 = vld [vmem:[%s313 + $0x50] sm:$0xff]
      %v320 = vld [vmem:[%s313 + $0x60] sm:$0xff]
      %v321 = vld [vmem:[%s313 + $0x70] sm:$0xff]
      %s322 = sadd.s32 %s309, 1
      %s323 = smul.u32 %s322, 4
      %s324 = scalar_lea.vmem %s272, %s323
      %v325 = vld [vmem:[%s324] sm:$0xf]
      %vm326 = vcmask 31744
      %v328 = vsel %vm326, %v314, 0
      %v331 = vsel %vm326, %v315, 0
      %v334 = vsel %vm326, %v316, 0
      %v337 = vsel %vm326, %v317, 0
      %v340 = vsel %vm326, %v318, 0
      %v343 = vsel %vm326, %v319, 0
      %v346 = vsel %vm326, %v320, 0
      %v349 = vsel %vm326, %v321, 0
      %vm351 = vcmask 1043456
      %v353 = vsel %vm351, %v325, 0
      %355 = vmatpush.msra.mxu0 0.0
      %356 = vmatpush.msra.mxu0 0.0
      %357 = vmatpush.msra.mxu0 0.0
      %358 = vmatpush.msra.mxu0 0.0
      %359 = vmatpush.msra.mxu0 0.0
      %360 = vmatpush.msra.mxu0 0.0
      %361 = vmatpush.msra.mxu0 0.0
      %362 = vmatpush.msra.mxu0 0.0
      %363 = vmatpush.msra.mxu0 0.0
      %364 = vmatpush.msra.mxu0 0.0
      %365 = vmatpush.msra.mxu0 0.0
      %366 = vmatpush.msra.mxu0 0.0
      %367 = vmatpush.msra.mxu0 0.0
      %368 = vmatpush.msra.mxu0 0.0
      %369 = vmatpush.msra.mxu0 0.0
      %370 = vmatpush.msra.mxu0 %v353
      %371 = vmatmul.f32.gmra.mxu0 %v328
      %v372 = vpop.f32.mrf.mxu0
      %v373 = vadd.f32 0.0, %v372
      %374 = vmatmul.f32.gmra.mxu0 %v331
      %v375 = vpop.f32.mrf.mxu0
      %v376 = vadd.f32 0.0, %v375
      %377 = vmatmul.f32.gmra.mxu0 %v334
      %v378 = vpop.f32.mrf.mxu0
      %v379 = vadd.f32 0.0, %v378
      %380 = vmatmul.f32.gmra.mxu0 %v337
      %v381 = vpop.f32.mrf.mxu0
      %v382 = vadd.f32 0.0, %v381
      %383 = vmatmul.f32.gmra.mxu0 %v340
      %v384 = vpop.f32.mrf.mxu0
      %v385 = vadd.f32 0.0, %v384
      %386 = vmatmul.f32.gmra.mxu0 %v343
      %v387 = vpop.f32.mrf.mxu0
      %v388 = vadd.f32 0.0, %v387
      %389 = vmatmul.f32.gmra.mxu0 %v346
      %v390 = vpop.f32.mrf.mxu0
      %v391 = vadd.f32 0.0, %v390
      %392 = vmatmul.f32.gmra.mxu0 %v349
      %v393 = vpop.f32.mrf.mxu0
      %v394 = vadd.f32 0.0, %v393
      %395 = vdwg.mxu0
      %v397 = vsel %vm326, %v301, 0
      %v400 = vsel %vm326, %v302, 0
      %v403 = vsel %vm326, %v303, 0
      %v406 = vsel %vm326, %v304, 0
      %v409 = vsel %vm326, %v305, 0
      %v412 = vsel %vm326, %v306, 0
      %v415 = vsel %vm326, %v307, 0
      %v418 = vsel %vm326, %v308, 0
      %v421 = vsel %vm351, %v312, 0
      %423 = vmatpush.msra.mxu0 0.0
      %424 = vmatpush.msra.mxu0 0.0
      %425 = vmatpush.msra.mxu0 0.0
      %426 = vmatpush.msra.mxu0 0.0
      %427 = vmatpush.msra.mxu0 0.0
      %428 = vmatpush.msra.mxu0 0.0
      %429 = vmatpush.msra.mxu0 0.0
      %430 = vmatpush.msra.mxu0 0.0
      %431 = vmatpush.msra.mxu0 0.0
      %432 = vmatpush.msra.mxu0 0.0
      %433 = vmatpush.msra.mxu0 0.0
      %434 = vmatpush.msra.mxu0 0.0
      %435 = vmatpush.msra.mxu0 0.0
      %436 = vmatpush.msra.mxu0 0.0
      %437 = vmatpush.msra.mxu0 0.0
      %438 = vmatpush.msra.mxu0 %v421
      %439 = vmatmul.f32.gmra.mxu0 %v397
      %v440 = vpop.f32.mrf.mxu0
      %v441 = vadd.f32 %v373, %v440
      %442 = vmatmul.f32.gmra.mxu0 %v400
      %v443 = vpop.f32.mrf.mxu0
      %v444 = vadd.f32 %v376, %v443
      %445 = vmatmul.f32.gmra.mxu0 %v403
      %v446 = vpop.f32.mrf.mxu0
      %v447 = vadd.f32 %v379, %v446
      %448 = vmatmul.f32.gmra.mxu0 %v406
      %v449 = vpop.f32.mrf.mxu0
      %v450 = vadd.f32 %v382, %v449
      %451 = vmatmul.f32.gmra.mxu0 %v409
      %v452 = vpop.f32.mrf.mxu0
      %v453 = vadd.f32 %v385, %v452
      %454 = vmatmul.f32.gmra.mxu0 %v412
      %v455 = vpop.f32.mrf.mxu0
      %v456 = vadd.f32 %v388, %v455
      %457 = vmatmul.f32.gmra.mxu0 %v415
      %v458 = vpop.f32.mrf.mxu0
      %v459 = vadd.f32 %v391, %v458
      %460 = vmatmul.f32.gmra.mxu0 %v418
      %v461 = vpop.f32.mrf.mxu0
      %v462 = vadd.f32 %v394, %v461
      %463 = vdwg.mxu0
      %v464 = vld [vmem:[%s264 + $0x1] sm:$0xff]
      %v465 = vld [vmem:[%s264 + $0x11] sm:$0xff]
      %v466 = vld [vmem:[%s264 + $0x21] sm:$0xff]
      %v467 = vld [vmem:[%s264 + $0x31] sm:$0xff]
      %v468 = vld [vmem:[%s264 + $0x41] sm:$0xff]
      %v469 = vld [vmem:[%s264 + $0x51] sm:$0xff]
      %v470 = vld [vmem:[%s264 + $0x61] sm:$0xff]
      %v471 = vld [vmem:[%s264 + $0x71] sm:$0xff]
      %s472 = sadd.s32 %s309, 2
      %s473 = smul.u32 %s472, 4
      %s474 = scalar_lea.vmem %s272, %s473
      %v475 = vld [vmem:[%s474] sm:$0xf]
      %v477 = vsel %vm326, %v464, 0
      %v480 = vsel %vm326, %v465, 0
      %v483 = vsel %vm326, %v466, 0
      %v486 = vsel %vm326, %v467, 0
      %v489 = vsel %vm326, %v468, 0
      %v492 = vsel %vm326, %v469, 0
      %v495 = vsel %vm326, %v470, 0
      %v498 = vsel %vm326, %v471, 0
      %v501 = vsel %vm351, %v475, 0
      %503 = vmatpush.msra.mxu0 0.0
      %504 = vmatpush.msra.mxu0 0.0
      %505 = vmatpush.msra.mxu0 0.0
      %506 = vmatpush.msra.mxu0 0.0
      %507 = vmatpush.msra.mxu0 0.0
      %508 = vmatpush.msra.mxu0 0.0
      %509 = vmatpush.msra.mxu0 0.0
      %510 = vmatpush.msra.mxu0 0.0
      %511 = vmatpush.msra.mxu0 0.0
      %512 = vmatpush.msra.mxu0 0.0
      %513 = vmatpush.msra.mxu0 0.0
      %514 = vmatpush.msra.mxu0 0.0
      %515 = vmatpush.msra.mxu0 0.0
      %516 = vmatpush.msra.mxu0 0.0
      %517 = vmatpush.msra.mxu0 0.0
      %518 = vmatpush.msra.mxu0 %v501
      %519 = vmatmul.f32.gmra.mxu0 %v477
      %v520 = vpop.f32.mrf.mxu0
      %v521 = vadd.f32 0.0, %v520
      %522 = vmatmul.f32.gmra.mxu0 %v480
      %v523 = vpop.f32.mrf.mxu0
      %v524 = vadd.f32 0.0, %v523
      %525 = vmatmul.f32.gmra.mxu0 %v483
      %v526 = vpop.f32.mrf.mxu0
      %v527 = vadd.f32 0.0, %v526
      %528 = vmatmul.f32.gmra.mxu0 %v486
      %v529 = vpop.f32.mrf.mxu0
      %v530 = vadd.f32 0.0, %v529
      %531 = vmatmul.f32.gmra.mxu0 %v489
      %v532 = vpop.f32.mrf.mxu0
      %v533 = vadd.f32 0.0, %v532
      %534 = vmatmul.f32.gmra.mxu0 %v492
      %v535 = vpop.f32.mrf.mxu0
      %v536 = vadd.f32 0.0, %v535
      %537 = vmatmul.f32.gmra.mxu0 %v495
      %v538 = vpop.f32.mrf.mxu0
      %v539 = vadd.f32 0.0, %v538
      %540 = vmatmul.f32.gmra.mxu0 %v498
      %v541 = vpop.f32.mrf.mxu0
      %v542 = vadd.f32 0.0, %v541
      %543 = vdwg.mxu0
      %v544 = vadd.f32 %v441, %v521
      %v545 = vadd.f32 %v444, %v524
      %v546 = vadd.f32 %v447, %v527
      %v547 = vadd.f32 %v450, %v530
      %v548 = vadd.f32 %v453, %v533
      %v549 = vadd.f32 %v456, %v536
      %v550 = vadd.f32 %v459, %v539
      %v551 = vadd.f32 %v462, %v542
      %s552 = scalar_lea.vmem %s264, 288
      %v553 = vld [vmem:[%s552] sm:$0xff]
      %v554 = vld [vmem:[%s552 + $0x10] sm:$0xff]
      %v555 = vld [vmem:[%s552 + $0x20] sm:$0xff]
      %v556 = vld [vmem:[%s552 + $0x30] sm:$0xff]
      %v557 = vld [vmem:[%s552 + $0x40] sm:$0xff]
      %v558 = vld [vmem:[%s552 + $0x50] sm:$0xff]
      %v559 = vld [vmem:[%s552 + $0x60] sm:$0xff]
      %v560 = vld [vmem:[%s552 + $0x70] sm:$0xff]
      %s561 = sadd.s32 %s309, 3
      %s562 = smul.u32 %s561, 4
      %s563 = scalar_lea.vmem %s272, %s562
      %v564 = vld [vmem:[%s563] sm:$0xf]
      %v566 = vsel %vm326, %v553, 0
      %v569 = vsel %vm326, %v554, 0
      %v572 = vsel %vm326, %v555, 0
      %v575 = vsel %vm326, %v556, 0
      %v578 = vsel %vm326, %v557, 0
      %v581 = vsel %vm326, %v558, 0
      %v584 = vsel %vm326, %v559, 0
      %v587 = vsel %vm326, %v560, 0
      %v590 = vsel %vm351, %v564, 0
      %592 = vmatpush.msra.mxu0 0.0
      %593 = vmatpush.msra.mxu0 0.0
      %594 = vmatpush.msra.mxu0 0.0
      %595 = vmatpush.msra.mxu0 0.0
      %596 = vmatpush.msra.mxu0 0.0
      %597 = vmatpush.msra.mxu0 0.0
      %598 = vmatpush.msra.mxu0 0.0
      %599 = vmatpush.msra.mxu0 0.0
      %600 = vmatpush.msra.mxu0 0.0
      %601 = vmatpush.msra.mxu0 0.0
      %602 = vmatpush.msra.mxu0 0.0
      %603 = vmatpush.msra.mxu0 0.0
      %604 = vmatpush.msra.mxu0 0.0
      %605 = vmatpush.msra.mxu0 0.0
      %606 = vmatpush.msra.mxu0 0.0
      %607 = vmatpush.msra.mxu0 %v590
      %608 = vmatmul.f32.gmra.mxu0 %v566
      %v609 = vpop.f32.mrf.mxu0
      %v610 = vadd.f32 0.0, %v609
      %611 = vmatmul.f32.gmra.mxu0 %v569
      %v612 = vpop.f32.mrf.mxu0
      %v613 = vadd.f32 0.0, %v612
      %614 = vmatmul.f32.gmra.mxu0 %v572
      %v615 = vpop.f32.mrf.mxu0
      %v616 = vadd.f32 0.0, %v615
      %617 = vmatmul.f32.gmra.mxu0 %v575
      %v618 = vpop.f32.mrf.mxu0
      %v619 = vadd.f32 0.0, %v618
      %620 = vmatmul.f32.gmra.mxu0 %v578
      %v621 = vpop.f32.mrf.mxu0
      %v622 = vadd.f32 0.0, %v621
      %623 = vmatmul.f32.gmra.mxu0 %v581
      %v624 = vpop.f32.mrf.mxu0
      %v625 = vadd.f32 0.0, %v624
      %626 = vmatmul.f32.gmra.mxu0 %v584
      %v627 = vpop.f32.mrf.mxu0
      %v628 = vadd.f32 0.0, %v627
      %629 = vmatmul.f32.gmra.mxu0 %v587
      %v630 = vpop.f32.mrf.mxu0
      %v631 = vadd.f32 0.0, %v630
      %632 = vdwg.mxu0
      %v633 = vadd.f32 %v544, %v610
      %v634 = vadd.f32 %v545, %v613
      %v635 = vadd.f32 %v546, %v616
      %v636 = vadd.f32 %v547, %v619
      %v637 = vadd.f32 %v548, %v622
      %v638 = vadd.f32 %v549, %v625
      %v639 = vadd.f32 %v550, %v628
      %v640 = vadd.f32 %v551, %v631
      %s641 = scalar_lea.vmem %s264, 432
      %v642 = vld [vmem:[%s641] sm:$0xff]
      %v643 = vld [vmem:[%s641 + $0x10] sm:$0xff]
      %v644 = vld [vmem:[%s641 + $0x20] sm:$0xff]
      %v645 = vld [vmem:[%s641 + $0x30] sm:$0xff]
      %v646 = vld [vmem:[%s641 + $0x40] sm:$0xff]
      %v647 = vld [vmem:[%s641 + $0x50] sm:$0xff]
      %v648 = vld [vmem:[%s641 + $0x60] sm:$0xff]
      %v649 = vld [vmem:[%s641 + $0x70] sm:$0xff]
      %s650 = sadd.s32 %s309, 4
      %s651 = smul.u32 %s650, 4
      %s652 = scalar_lea.vmem %s272, %s651
      %v653 = vld [vmem:[%s652] sm:$0xf]
      %v655 = vsel %vm326, %v642, 0
      %v658 = vsel %vm326, %v643, 0
      %v661 = vsel %vm326, %v644, 0
      %v664 = vsel %vm326, %v645, 0
      %v667 = vsel %vm326, %v646, 0
      %v670 = vsel %vm326, %v647, 0
      %v673 = vsel %vm326, %v648, 0
      %v676 = vsel %vm326, %v649, 0
      %v679 = vsel %vm351, %v653, 0
      %681 = vmatpush.msra.mxu0 0.0
      %682 = vmatpush.msra.mxu0 0.0
      %683 = vmatpush.msra.mxu0 0.0
      %684 = vmatpush.msra.mxu0 0.0
      %685 = vmatpush.msra.mxu0 0.0
      %686 = vmatpush.msra.mxu0 0.0
      %687 = vmatpush.msra.mxu0 0.0
      %688 = vmatpush.msra.mxu0 0.0
      %689 = vmatpush.msra.mxu0 0.0
      %690 = vmatpush.msra.mxu0 0.0
      %691 = vmatpush.msra.mxu0 0.0
      %692 = vmatpush.msra.mxu0 0.0
      %693 = vmatpush.msra.mxu0 0.0
      %694 = vmatpush.msra.mxu0 0.0
      %695 = vmatpush.msra.mxu0 0.0
      %696 = vmatpush.msra.mxu0 %v679
      %697 = vmatmul.f32.gmra.mxu0 %v655
      %v698 = vpop.f32.mrf.mxu0
      %v699 = vadd.f32 0.0, %v698
      %700 = vmatmul.f32.gmra.mxu0 %v658
      %v701 = vpop.f32.mrf.mxu0
      %v702 = vadd.f32 0.0, %v701
      %703 = vmatmul.f32.gmra.mxu0 %v661
      %v704 = vpop.f32.mrf.mxu0
      %v705 = vadd.f32 0.0, %v704
      %706 = vmatmul.f32.gmra.mxu0 %v664
      %v707 = vpop.f32.mrf.mxu0
      %v708 = vadd.f32 0.0, %v707
      %709 = vmatmul.f32.gmra.mxu0 %v667
      %v710 = vpop.f32.mrf.mxu0
      %v711 = vadd.f32 0.0, %v710
      %712 = vmatmul.f32.gmra.mxu0 %v670
      %v713 = vpop.f32.mrf.mxu0
      %v714 = vadd.f32 0.0, %v713
      %715 = vmatmul.f32.gmra.mxu0 %v673
      %v716 = vpop.f32.mrf.mxu0
      %v717 = vadd.f32 0.0, %v716
      %718 = vmatmul.f32.gmra.mxu0 %v676
      %v719 = vpop.f32.mrf.mxu0
      %v720 = vadd.f32 0.0, %v719
      %721 = vdwg.mxu0
      %v722 = vadd.f32 %v633, %v699
      %v723 = vadd.f32 %v634, %v702
      %v724 = vadd.f32 %v635, %v705
      %v725 = vadd.f32 %v636, %v708
      %v726 = vadd.f32 %v637, %v711
      %v727 = vadd.f32 %v638, %v714
      %v728 = vadd.f32 %v639, %v717
      %v729 = vadd.f32 %v640, %v720
      %v730 = vld [vmem:[%s552 + $0x1] sm:$0xff]
      %v731 = vld [vmem:[%s552 + $0x11] sm:$0xff]
      %v732 = vld [vmem:[%s552 + $0x21] sm:$0xff]
      %v733 = vld [vmem:[%s552 + $0x31] sm:$0xff]
      %v734 = vld [vmem:[%s552 + $0x41] sm:$0xff]
      %v735 = vld [vmem:[%s552 + $0x51] sm:$0xff]
      %v736 = vld [vmem:[%s552 + $0x61] sm:$0xff]
      %v737 = vld [vmem:[%s552 + $0x71] sm:$0xff]
      %s738 = sadd.s32 %s309, 5
      %s739 = smul.u32 %s738, 4
      %s740 = scalar_lea.vmem %s272, %s739
      %v741 = vld [vmem:[%s740] sm:$0xf]
      %v743 = vsel %vm326, %v730, 0
      %v746 = vsel %vm326, %v731, 0
      %v749 = vsel %vm326, %v732, 0
      %v752 = vsel %vm326, %v733, 0
      %v755 = vsel %vm326, %v734, 0
      %v758 = vsel %vm326, %v735, 0
      %v761 = vsel %vm326, %v736, 0
      %v764 = vsel %vm326, %v737, 0
      %v767 = vsel %vm351, %v741, 0
      %769 = vmatpush.msra.mxu0 0.0
      %770 = vmatpush.msra.mxu0 0.0
      %771 = vmatpush.msra.mxu0 0.0
      %772 = vmatpush.msra.mxu0 0.0
      %773 = vmatpush.msra.mxu0 0.0
      %774 = vmatpush.msra.mxu0 0.0
      %775 = vmatpush.msra.mxu0 0.0
      %776 = vmatpush.msra.mxu0 0.0
      %777 = vmatpush.msra.mxu0 0.0
      %778 = vmatpush.msra.mxu0 0.0
      %779 = vmatpush.msra.mxu0 0.0
      %780 = vmatpush.msra.mxu0 0.0
      %781 = vmatpush.msra.mxu0 0.0
      %782 = vmatpush.msra.mxu0 0.0
      %783 = vmatpush.msra.mxu0 0.0
      %784 = vmatpush.msra.mxu0 %v767
      %785 = vmatmul.f32.gmra.mxu0 %v743
      %v786 = vpop.f32.mrf.mxu0
      %v787 = vadd.f32 0.0, %v786
      %788 = vmatmul.f32.gmra.mxu0 %v746
      %v789 = vpop.f32.mrf.mxu0
      %v790 = vadd.f32 0.0, %v789
      %791 = vmatmul.f32.gmra.mxu0 %v749
      %v792 = vpop.f32.mrf.mxu0
      %v793 = vadd.f32 0.0, %v792
      %794 = vmatmul.f32.gmra.mxu0 %v752
      %v795 = vpop.f32.mrf.mxu0
      %v796 = vadd.f32 0.0, %v795
      %797 = vmatmul.f32.gmra.mxu0 %v755
      %v798 = vpop.f32.mrf.mxu0
      %v799 = vadd.f32 0.0, %v798
      %800 = vmatmul.f32.gmra.mxu0 %v758
      %v801 = vpop.f32.mrf.mxu0
      %v802 = vadd.f32 0.0, %v801
      %803 = vmatmul.f32.gmra.mxu0 %v761
      %v804 = vpop.f32.mrf.mxu0
      %v805 = vadd.f32 0.0, %v804
      %806 = vmatmul.f32.gmra.mxu0 %v764
      %v807 = vpop.f32.mrf.mxu0
      %v808 = vadd.f32 0.0, %v807
      %809 = vdwg.mxu0
      %v810 = vadd.f32 %v722, %v787
      %v811 = vadd.f32 %v723, %v790
      %v812 = vadd.f32 %v724, %v793
      %v813 = vadd.f32 %v725, %v796
      %v814 = vadd.f32 %v726, %v799
      %v815 = vadd.f32 %v727, %v802
      %v816 = vadd.f32 %v728, %v805
      %v817 = vadd.f32 %v729, %v808
      %s818 = scalar_lea.vmem %s264, 16
      %v819 = vld [vmem:[%s818] sm:$0xff]
      %v820 = vld [vmem:[%s818 + $0x10] sm:$0xff]
      %v821 = vld [vmem:[%s818 + $0x20] sm:$0xff]
      %v822 = vld [vmem:[%s818 + $0x30] sm:$0xff]
      %v823 = vld [vmem:[%s818 + $0x40] sm:$0xff]
      %v824 = vld [vmem:[%s818 + $0x50] sm:$0xff]
      %v825 = vld [vmem:[%s818 + $0x60] sm:$0xff]
      %v826 = vld [vmem:[%s818 + $0x70] sm:$0xff]
      %s827 = sadd.s32 %s309, 6
      %s828 = smul.u32 %s827, 4
      %s829 = scalar_lea.vmem %s272, %s828
      %v830 = vld [vmem:[%s829] sm:$0xf]
      %v832 = vsel %vm326, %v819, 0
      %v835 = vsel %vm326, %v820, 0
      %v838 = vsel %vm326, %v821, 0
      %v841 = vsel %vm326, %v822, 0
      %v844 = vsel %vm326, %v823, 0
      %v847 = vsel %vm326, %v824, 0
      %v850 = vsel %vm326, %v825, 0
      %v853 = vsel %vm326, %v826, 0
      %v856 = vsel %vm351, %v830, 0
      %858 = vmatpush.msra.mxu0 0.0
      %859 = vmatpush.msra.mxu0 0.0
      %860 = vmatpush.msra.mxu0 0.0
      %861 = vmatpush.msra.mxu0 0.0
      %862 = vmatpush.msra.mxu0 0.0
      %863 = vmatpush.msra.mxu0 0.0
      %864 = vmatpush.msra.mxu0 0.0
      %865 = vmatpush.msra.mxu0 0.0
      %866 = vmatpush.msra.mxu0 0.0
      %867 = vmatpush.msra.mxu0 0.0
      %868 = vmatpush.msra.mxu0 0.0
      %869 = vmatpush.msra.mxu0 0.0
      %870 = vmatpush.msra.mxu0 0.0
      %871 = vmatpush.msra.mxu0 0.0
      %872 = vmatpush.msra.mxu0 0.0
      %873 = vmatpush.msra.mxu0 %v856
      %874 = vmatmul.f32.gmra.mxu0 %v832
      %v875 = vpop.f32.mrf.mxu0
      %v876 = vadd.f32 0.0, %v875
      %877 = vmatmul.f32.gmra.mxu0 %v835
      %v878 = vpop.f32.mrf.mxu0
      %v879 = vadd.f32 0.0, %v878
      %880 = vmatmul.f32.gmra.mxu0 %v838
      %v881 = vpop.f32.mrf.mxu0
      %v882 = vadd.f32 0.0, %v881
      %883 = vmatmul.f32.gmra.mxu0 %v841
      %v884 = vpop.f32.mrf.mxu0
      %v885 = vadd.f32 0.0, %v884
      %886 = vmatmul.f32.gmra.mxu0 %v844
      %v887 = vpop.f32.mrf.mxu0
      %v888 = vadd.f32 0.0, %v887
      %889 = vmatmul.f32.gmra.mxu0 %v847
      %v890 = vpop.f32.mrf.mxu0
      %v891 = vadd.f32 0.0, %v890
      %892 = vmatmul.f32.gmra.mxu0 %v850
      %v893 = vpop.f32.mrf.mxu0
      %v894 = vadd.f32 0.0, %v893
      %895 = vmatmul.f32.gmra.mxu0 %v853
      %v896 = vpop.f32.mrf.mxu0
      %v897 = vadd.f32 0.0, %v896
      %898 = vdwg.mxu0
      %v899 = vadd.f32 %v810, %v876
      %v900 = vadd.f32 %v811, %v879
      %v901 = vadd.f32 %v812, %v882
      %v902 = vadd.f32 %v813, %v885
      %v903 = vadd.f32 %v814, %v888
      %v904 = vadd.f32 %v815, %v891
      %v905 = vadd.f32 %v816, %v894
      %v906 = vadd.f32 %v817, %v897
      %s907 = scalar_lea.vmem %s264, 160
      %v908 = vld [vmem:[%s907] sm:$0xff]
      %v909 = vld [vmem:[%s907 + $0x10] sm:$0xff]
      %v910 = vld [vmem:[%s907 + $0x20] sm:$0xff]
      %v911 = vld [vmem:[%s907 + $0x30] sm:$0xff]
      %v912 = vld [vmem:[%s907 + $0x40] sm:$0xff]
      %v913 = vld [vmem:[%s907 + $0x50] sm:$0xff]
      %v914 = vld [vmem:[%s907 + $0x60] sm:$0xff]
      %v915 = vld [vmem:[%s907 + $0x70] sm:$0xff]
      %s916 = sadd.s32 %s309, 7
      %s917 = smul.u32 %s916, 4
      %s918 = scalar_lea.vmem %s272, %s917
      %v919 = vld [vmem:[%s918] sm:$0xf]
      %v921 = vsel %vm326, %v908, 0
      %v924 = vsel %vm326, %v909, 0
      %v927 = vsel %vm326, %v910, 0
      %v930 = vsel %vm326, %v911, 0
      %v933 = vsel %vm326, %v912, 0
      %v936 = vsel %vm326, %v913, 0
      %v939 = vsel %vm326, %v914, 0
      %v942 = vsel %vm326, %v915, 0
      %v945 = vsel %vm351, %v919, 0
      %947 = vmatpush.msra.mxu0 0.0
      %948 = vmatpush.msra.mxu0 0.0
      %949 = vmatpush.msra.mxu0 0.0
      %950 = vmatpush.msra.mxu0 0.0
      %951 = vmatpush.msra.mxu0 0.0
      %952 = vmatpush.msra.mxu0 0.0
      %953 = vmatpush.msra.mxu0 0.0
      %954 = vmatpush.msra.mxu0 0.0
      %955 = vmatpush.msra.mxu0 0.0
      %956 = vmatpush.msra.mxu0 0.0
      %957 = vmatpush.msra.mxu0 0.0
      %958 = vmatpush.msra.mxu0 0.0
      %959 = vmatpush.msra.mxu0 0.0
      %960 = vmatpush.msra.mxu0 0.0
      %961 = vmatpush.msra.mxu0 0.0
      %962 = vmatpush.msra.mxu0 %v945
      %963 = vmatmul.f32.gmra.mxu0 %v921
      %v964 = vpop.f32.mrf.mxu0
      %v965 = vadd.f32 0.0, %v964
      %966 = vmatmul.f32.gmra.mxu0 %v924
      %v967 = vpop.f32.mrf.mxu0
      %v968 = vadd.f32 0.0, %v967
      %969 = vmatmul.f32.gmra.mxu0 %v927
      %v970 = vpop.f32.mrf.mxu0
      %v971 = vadd.f32 0.0, %v970
      %972 = vmatmul.f32.gmra.mxu0 %v930
      %v973 = vpop.f32.mrf.mxu0
      %v974 = vadd.f32 0.0, %v973
      %975 = vmatmul.f32.gmra.mxu0 %v933
      %v976 = vpop.f32.mrf.mxu0
      %v977 = vadd.f32 0.0, %v976
      %978 = vmatmul.f32.gmra.mxu0 %v936
      %v979 = vpop.f32.mrf.mxu0
      %v980 = vadd.f32 0.0, %v979
      %981 = vmatmul.f32.gmra.mxu0 %v939
      %v982 = vpop.f32.mrf.mxu0
      %v983 = vadd.f32 0.0, %v982
      %984 = vmatmul.f32.gmra.mxu0 %v942
      %v985 = vpop.f32.mrf.mxu0
      %v986 = vadd.f32 0.0, %v985
      %987 = vdwg.mxu0
      %v988 = vadd.f32 %v899, %v965
      %v989 = vadd.f32 %v900, %v968
      %v990 = vadd.f32 %v901, %v971
      %v991 = vadd.f32 %v902, %v974
      %v992 = vadd.f32 %v903, %v977
      %v993 = vadd.f32 %v904, %v980
      %v994 = vadd.f32 %v905, %v983
      %v995 = vadd.f32 %v906, %v986
      %v996 = vld [vmem:[%s818 + $0x1] sm:$0xff]
      %v997 = vld [vmem:[%s818 + $0x11] sm:$0xff]
      %v998 = vld [vmem:[%s818 + $0x21] sm:$0xff]
      %v999 = vld [vmem:[%s818 + $0x31] sm:$0xff]
      %v1000 = vld [vmem:[%s818 + $0x41] sm:$0xff]
      %v1001 = vld [vmem:[%s818 + $0x51] sm:$0xff]
      %v1002 = vld [vmem:[%s818 + $0x61] sm:$0xff]
      %v1003 = vld [vmem:[%s818 + $0x71] sm:$0xff]
      %s1004 = sadd.s32 %s309, 8
      %s1005 = smul.u32 %s1004, 4
      %s1006 = scalar_lea.vmem %s272, %s1005
      %v1007 = vld [vmem:[%s1006] sm:$0xf]
      %v1009 = vsel %vm326, %v996, 0
      %v1012 = vsel %vm326, %v997, 0
      %v1015 = vsel %vm326, %v998, 0
      %v1018 = vsel %vm326, %v999, 0
      %v1021 = vsel %vm326, %v1000, 0
      %v1024 = vsel %vm326, %v1001, 0
      %v1027 = vsel %vm326, %v1002, 0
      %v1030 = vsel %vm326, %v1003, 0
      %v1033 = vsel %vm351, %v1007, 0
      %1035 = vmatpush.msra.mxu0 0.0
      %1036 = vmatpush.msra.mxu0 0.0
      %1037 = vmatpush.msra.mxu0 0.0
      %1038 = vmatpush.msra.mxu0 0.0
      %1039 = vmatpush.msra.mxu0 0.0
      %1040 = vmatpush.msra.mxu0 0.0
      %1041 = vmatpush.msra.mxu0 0.0
      %1042 = vmatpush.msra.mxu0 0.0
      %1043 = vmatpush.msra.mxu0 0.0
      %1044 = vmatpush.msra.mxu0 0.0
      %1045 = vmatpush.msra.mxu0 0.0
      %1046 = vmatpush.msra.mxu0 0.0
      %1047 = vmatpush.msra.mxu0 0.0
      %1048 = vmatpush.msra.mxu0 0.0
      %1049 = vmatpush.msra.mxu0 0.0
      %1050 = vmatpush.msra.mxu0 %v1033
      %1051 = vmatmul.f32.gmra.mxu0 %v1009
      %v1052 = vpop.f32.mrf.mxu0
      %v1053 = vadd.f32 0.0, %v1052
      %1054 = vmatmul.f32.gmra.mxu0 %v1012
      %v1055 = vpop.f32.mrf.mxu0
      %v1056 = vadd.f32 0.0, %v1055
      %1057 = vmatmul.f32.gmra.mxu0 %v1015
      %v1058 = vpop.f32.mrf.mxu0
      %v1059 = vadd.f32 0.0, %v1058
      %1060 = vmatmul.f32.gmra.mxu0 %v1018
      %v1061 = vpop.f32.mrf.mxu0
      %v1062 = vadd.f32 0.0, %v1061
      %1063 = vmatmul.f32.gmra.mxu0 %v1021
      %v1064 = vpop.f32.mrf.mxu0
      %v1065 = vadd.f32 0.0, %v1064
      %1066 = vmatmul.f32.gmra.mxu0 %v1024
      %v1067 = vpop.f32.mrf.mxu0
      %v1068 = vadd.f32 0.0, %v1067
      %1069 = vmatmul.f32.gmra.mxu0 %v1027
      %v1070 = vpop.f32.mrf.mxu0
      %v1071 = vadd.f32 0.0, %v1070
      %1072 = vmatmul.f32.gmra.mxu0 %v1030
      %v1073 = vpop.f32.mrf.mxu0
      %v1074 = vadd.f32 0.0, %v1073
      %1075 = vdwg.mxu0
      %v1076 = vadd.f32 %v988, %v1053
      %v1077 = vadd.f32 %v989, %v1056
      %v1078 = vadd.f32 %v990, %v1059
      %v1079 = vadd.f32 %v991, %v1062
      %v1080 = vadd.f32 %v992, %v1065
      %v1081 = vadd.f32 %v993, %v1068
      %v1082 = vadd.f32 %v994, %v1071
      %v1083 = vadd.f32 %v995, %v1074
      %v1084 = vld [vmem:[#allocation2] sm:$0xff]
      %v1085 = vld [vmem:[#allocation2 + $0x8] sm:$0xff]
      %v1086 = vld [vmem:[#allocation2 + $0x10] sm:$0xff]
      %v1087 = vld [vmem:[#allocation2 + $0x18] sm:$0xff]
      %v1088 = vld [vmem:[#allocation2 + $0x20] sm:$0xff]
      %v1089 = vld [vmem:[#allocation2 + $0x28] sm:$0xff]
      %v1090 = vld [vmem:[#allocation2 + $0x30] sm:$0xff]
      %v1091 = vld [vmem:[#allocation2 + $0x38] sm:$0xff]
      %v1092 = vadd.f32 %v1084, %v1076
      %v1093 = vadd.f32 %v1085, %v1077
      %v1094 = vadd.f32 %v1086, %v1078
      %v1095 = vadd.f32 %v1087, %v1079
      %v1096 = vadd.f32 %v1088, %v1080
      %v1097 = vadd.f32 %v1089, %v1081
      %v1098 = vadd.f32 %v1090, %v1082
      %v1099 = vadd.f32 %v1091, %v1083
      %1100 = vst.msk [vmem:[#allocation2] sm:$0xff] %vm326, %v1092
      %1101 = vst.msk [vmem:[#allocation2 + $0x8] sm:$0xff] %vm326, %v1093
      %1102 = vst.msk [vmem:[#allocation2 + $0x10] sm:$0xff] %vm326, %v1094
      %1103 = vst.msk [vmem:[#allocation2 + $0x18] sm:$0xff] %vm326, %v1095
      %1104 = vst.msk [vmem:[#allocation2 + $0x20] sm:$0xff] %vm326, %v1096
      %1105 = vst.msk [vmem:[#allocation2 + $0x28] sm:$0xff] %vm326, %v1097
      %1106 = vst.msk [vmem:[#allocation2 + $0x30] sm:$0xff] %vm326, %v1098
      %1107 = vst.msk [vmem:[#allocation2 + $0x38] sm:$0xff] %vm326, %v1099
      %p1108 = scmp.eq.s32.totalorder %s23, 2
      // Predicated region
      $region37: #{tpu_custom_call.1} parent=31 // pred_check
        %p1109 = pneg %p1108
      $region38: #{tpu_custom_call.1} parent=31 // pred_check_branch
        %1111 = sbr.rel (%p1109) target = $region40
      $region39: #{tpu_custom_call.1} parent=31 // pred_region
        %v1112 = vld [vmem:[#allocation2] sm:$0xff]
        %v1113 = vld [vmem:[#allocation2 + $0x8] sm:$0xff]
        %v1114 = vld [vmem:[#allocation2 + $0x10] sm:$0xff]
        %v1115 = vld [vmem:[#allocation2 + $0x18] sm:$0xff]
        %v1116 = vld [vmem:[#allocation2 + $0x20] sm:$0xff]
        %v1117 = vld [vmem:[#allocation2 + $0x28] sm:$0xff]
        %v1118 = vld [vmem:[#allocation2 + $0x30] sm:$0xff]
        %v1119 = vld [vmem:[#allocation2 + $0x38] sm:$0xff]
        %v1120 = vld [vmem:[%s275] sm:$0x1]
        %v1122 = vperm.slane %v1120, 0
        %v1124 = vadd.f32 %v1112, %v1122
        %v1125 = vadd.f32 %v1113, %v1122
        %v1126 = vadd.f32 %v1114, %v1122
        %v1127 = vadd.f32 %v1115, %v1122
        %v1128 = vadd.f32 %v1116, %v1122
        %v1129 = vadd.f32 %v1117, %v1122
        %v1130 = vadd.f32 %v1118, %v1122
        %v1131 = vadd.f32 %v1119, %v1122
        %1132 = vst.msk [vmem:[%s287] sm:$0xff] %vm326, %v1124
        %1133 = vst.msk [vmem:[%s287 + $0x8] sm:$0xff] %vm326, %v1125
        %1134 = vst.msk [vmem:[%s287 + $0x10] sm:$0xff] %vm326, %v1126
        %1135 = vst.msk [vmem:[%s287 + $0x18] sm:$0xff] %vm326, %v1127
        %1136 = vst.msk [vmem:[%s287 + $0x20] sm:$0xff] %vm326, %v1128
        %1137 = vst.msk [vmem:[%s287 + $0x28] sm:$0xff] %vm326, %v1129
        %1138 = vst.msk [vmem:[%s287 + $0x30] sm:$0xff] %vm326, %v1130
        %1139 = vst.msk [vmem:[%s287 + $0x38] sm:$0xff] %vm326, %v1131
      $region40: #{tpu_custom_call.1} parent=31 // pred_fallthru
        _
      %p1140 = scmp.lt.s32.totalorder %s20, 1
      %s1141 = scalar_select %p1140, %s20, 1
      %p1142 = scmp.lt.s32.totalorder %s22, 4
      %s1143 = scalar_select %p1142, %s22, 4
      %p1144 = scmp.lt.s32.totalorder %s21, 0
      %s1145 = scalar_select %p1144, %s21, 0
      %s1146 = smul.addr %s1143, 8
      %s1147 = sadd.s32 %s1145, %s1146
      %s1148 = smul.addr %s1141, 40
      %s1149 = sadd.s32 %s1147, %s1148
      %s1150 = smul.addr %s1149, 8
      %s1151 = scalar_lea.vmem %s3, %s1150
      // Predicated region
      $region41: #{tpu_custom_call.1} parent=31 // pred_check
        %p1152 = pneg %p150
      $region42: #{tpu_custom_call.1} parent=31 // pred_check_branch
        %1154 = sbr.rel (%p1152) target = $region44
      $region43: #{tpu_custom_call.1} parent=31 // pred_region
        _
      $region44: #{tpu_custom_call.1} parent=31 // pred_fallthru
        _
    $region32: #{tpu_custom_call.1} parent=5 // pred_fallthru
      _
    %p1155 = scmp.le.s32.totalorder 2, %s9
    // Predicated region
    $region45: #{tpu_custom_call.1} parent=5 // pred_check
      %p1156 = pneg %p1155
    $region46: #{tpu_custom_call.1} parent=5 // pred_check_branch
      %1158 = sbr.rel (%p1156) target = $region48
    $region47: #{tpu_custom_call.1} parent=5 // pred_region
      %s1159 = ssub.s32 %s9, 2
      // Predicated region
      $region49: #{tpu_custom_call.1} parent=47 // pred_check
        %p1160 = pneg %p156
      $region50: #{tpu_custom_call.1} parent=47 // pred_check_branch
        %1162 = sbr.rel (%p1160) target = $region52
      $region51: #{tpu_custom_call.1} parent=47 // pred_region
        %p1163 = scmp.lt.s32.totalorder %s24, 1
        %s1164 = scalar_select %p1163, %s24, 1
        %p1165 = scmp.lt.s32.totalorder %s26, 4
        %s1166 = scalar_select %p1165, %s26, 4
        %p1167 = scmp.lt.s32.totalorder %s25, 0
        %s1168 = scalar_select %p1167, %s25, 0
        %s1169 = smul.addr %s1166, 8
        %s1170 = sadd.s32 %s1168, %s1169
        %s1171 = smul.addr %s1164, 40
        %s1172 = sadd.s32 %s1170, %s1171
        %s1173 = smul.addr %s1172, 8
        %s1174 = scalar_lea.vmem %s3, %s1173
      $region52: #{tpu_custom_call.1} parent=47 // pred_fallthru
        _
    $region48: #{tpu_custom_call.1} parent=5 // pred_fallthru
      _
  $region6: #{tpu_custom_call.1} parent=0 // loop_footer
    %s13 = sadd.s32 1, %s9
  $region7: #{tpu_custom_call.1} parent=0 // loop_footer_branch
    %8 = sbr.rel target = $region3
  $region8: #{tpu_custom_call.1} parent=0 // loop_exit
    _

</llo_original>
